<compile_context>
chip_gen: v7x
topology: tpu7x:2x2x1
jax: 0.10.0
libtpu: 0.0.40
codegen_flags: <defaults>
</compile_context>

<pallas_src>
import jax
import jax.numpy as jnp
from jax.experimental import pallas as pl
from jax.experimental.pallas import tpu as pltpu

_LANES = 128       # vreg lane width / MXU alignment
_OUT_LANES = 128   # lane-dense output slab width (sliced to 1 outside)


def _round_up(n, m):
    return ((n + m - 1) // m) * m


def _make_mlprune_kernel(num_layers, compute_dtype, out_lanes):
    """Fused forward: Linear->ReLU x (num_layers-1) on the MXU, final [H,1]
    layer as a VPU/XLU reduction. Everything lives in VMEM."""

    def kernel(*refs):
        x_ref = refs[0]
        o_ref = refs[-1]
        wb = refs[1:-1]

        # Layers 0 .. num_layers-2: bf16 MXU matmul, f32 accumulation,
        # f32 bias-add + ReLU epilogue.
        h = x_ref[...]
        for l in range(num_layers - 1):
            w = wb[2 * l][...]
            b = wb[2 * l + 1][...]
            acc = jnp.dot(h.astype(compute_dtype), w,
                          preferred_element_type=jnp.float32)
            h = jnp.maximum(acc + b.astype(jnp.float32), 0.0)

        # Final [H,1] layer: no N=1 MXU matmul; do a VPU multiply and a
        # cross-lane (XLU) reduction, then broadcast across 128 lanes so the
        # store is lane-dense and unmasked.
        w_last = wb[2 * (num_layers - 1)][...].astype(jnp.float32)      # (1, H_pad)
        b_last = wb[2 * (num_layers - 1) + 1][...].astype(jnp.float32)  # (1, out_lanes)
        acc = jnp.sum(h * w_last, axis=-1, keepdims=True)               # (TB, 1)
        out = jnp.maximum(
            jnp.broadcast_to(acc, (acc.shape[0], out_lanes)) + b_last, 0.0)
        o_ref[...] = out.astype(o_ref.dtype)

    return kernel


def _pad_params(params, input_size, hidden_size, compute_dtype):
    """Zero-pad to lane multiples. Weights -> compute_dtype [K_pad, N_pad],
    biases stay f32. The last layer's [H,1] weight is stored as a row
    [1, H_pad] and its scalar bias is replicated across the output lanes."""
    in_pad = _round_up(input_size, _LANES)
    h_pad = _round_up(hidden_size, _LANES)
    n = len(params)
    padded = []
    for i, (w, b) in enumerate(params):
        if i < n - 1:
            k_pad = in_pad if i == 0 else h_pad
            wp = jnp.zeros((k_pad, h_pad), compute_dtype)
            wp = wp.at[:w.shape[0], :w.shape[1]].set(w.astype(compute_dtype))
            bp = jnp.zeros((1, h_pad), jnp.float32)
            bp = bp.at[:, :b.shape[1]].set(b.astype(jnp.float32))
        else:
            wp = jnp.zeros((1, h_pad), compute_dtype)
            wp = wp.at[0, :w.shape[0]].set(w[:, 0].astype(compute_dtype))
            bp = jnp.full((1, _OUT_LANES), b[0, 0], jnp.float32)
        padded.append((wp, bp))
    return padded, in_pad, h_pad


def _pick_batch_tile(batch, h_pad):
    """Multiples of 128 fill the MXU on every chip generation; cap TB so the
    f32 inter-layer activation (TB x H_pad) stays around 128 KiB (vreg/VMEM
    pressure), and never pad the batch further than necessary."""
    tb = 512
    while tb > 128 and tb * h_pad * 4 > 128 * 1024:
        tb //= 2
    tb = min(tb, _round_up(max(batch, 1), 128))
    return max(tb, 128)


def mlprune_forward(x, params, *, compute_dtype=jnp.bfloat16, batch_tile=None):
    """x: [B, input_size] f32.  params: list of (W:[in,out], b:[1,out]) f32
    (W is the transpose of torch's nn.Linear weight). Returns [B, 1] f32."""
    batch, input_size = x.shape
    hidden_size = params[0][0].shape[1]
    num_layers = len(params)

    padded_params, in_pad, h_pad = _pad_params(
        params, input_size, hidden_size, compute_dtype)

    tb = batch_tile or _pick_batch_tile(batch, h_pad)
    b_pad = _round_up(batch, tb)
    num_tiles = b_pad // tb

    xp = jnp.zeros((b_pad, in_pad), compute_dtype)
    xp = xp.at[:batch, :input_size].set(x.astype(compute_dtype))

    flat = [xp]
    for w, b in padded_params:
        flat.append(w)
        flat.append(b)

    # x / out tile over the batch grid; weights & biases use a constant
    # index_map so they are DMA'd into VMEM once and stay resident.
    in_specs = [pl.BlockSpec((tb, in_pad), lambda i: (i, 0))]
    for a in flat[1:]:
        in_specs.append(pl.BlockSpec(a.shape, lambda i: (0, 0)))
    out_specs = pl.BlockSpec((tb, _OUT_LANES), lambda i: (i, 0))

    # VMEM budget: double-buffered tiles + (double-buffered) resident params
    # + f32 activation headroom; cap so it also fits v7x's 64 MiB VMEM.
    param_bytes = sum(int(a.size) * a.dtype.itemsize for a in flat[1:])
    tile_bytes = tb * in_pad * xp.dtype.itemsize + tb * _OUT_LANES * 4
    act_bytes = tb * h_pad * 4
    vmem_need = 2 * (param_bytes + tile_bytes) + 4 * act_bytes
    vmem_limit = int(min(60 * 2**20, max(2 * vmem_need, 16 * 2**20)))

    depth = num_layers - 2
    flops = 2 * b_pad * (in_pad * h_pad + depth * h_pad * h_pad + h_pad)
    bytes_accessed = (int(xp.size) * xp.dtype.itemsize + param_bytes
                      + b_pad * _OUT_LANES * 4)

    kernel = _make_mlprune_kernel(num_layers, compute_dtype, _OUT_LANES)

    out_pad = pl.pallas_call(
        kernel,
        out_shape=jax.ShapeDtypeStruct((b_pad, _OUT_LANES), jnp.float32),
        grid=(num_tiles,),
        in_specs=in_specs,
        out_specs=out_specs,
        compiler_params=pltpu.CompilerParams(
            dimension_semantics=("parallel",),
            vmem_limit_bytes=vmem_limit),
        cost_estimate=pl.CostEstimate(
            flops=flops, transcendentals=0, bytes_accessed=bytes_accessed),
    )(*flat)

    # Lane-dense output slab -> the module's [B, 1] logits.
    return out_pad[:batch, :1]


def init_params(key, input_size, hidden_size, depth):
    """Deterministic init mirroring the PyTorch layer shapes.
    Weights stored as [in, out] (transpose of torch's [out, in])."""
    dims = [(input_size, hidden_size)]
    dims += [(hidden_size, hidden_size) for _ in range(depth)]
    dims += [(hidden_size, 1)]
    params = []
    for (fan_in, fan_out) in dims:
        key, kw, kb = jax.random.split(key, 3)
        bound = 1.0 / jnp.sqrt(jnp.float32(fan_in))
        w = jax.random.uniform(kw, (fan_in, fan_out), jnp.float32, -bound, bound)
        b = jax.random.uniform(kb, (1, fan_out), jnp.float32, -bound, bound)
        params.append((w, b))
    return params


def mlprune_reference(x, params, compute_dtype=jnp.bfloat16):
    """Pure-JAX reference mirroring the kernel's cast/accumulate pipeline."""
    ws = [w for w, _ in params]
    bs = [b for _, b in params]
    h = x.astype(jnp.float32)
    for l in range(len(params) - 1):
        y = jnp.dot(h.astype(compute_dtype), ws[l].astype(compute_dtype),
                    preferred_element_type=jnp.float32)
        h = jnp.maximum(y + bs[l].astype(jnp.float32), 0.0)
    w_last = ws[-1].astype(compute_dtype).astype(jnp.float32)   # (H, 1)
    acc = jnp.sum(h * w_last[:, 0][None, :], axis=-1, keepdims=True)
    return jnp.maximum(acc + bs[-1].astype(jnp.float32), 0.0)


if __name__ == "__main__":
    # Small shapes consistent with the module's forward: [batch, input_size].
    batch, input_size, hidden_size, depth = 8, 32, 32, 2

    key = jax.random.PRNGKey(0)
    key, kx = jax.random.split(key)
    x = jax.random.normal(kx, (batch, input_size), jnp.float32)

    params = init_params(key, input_size, hidden_size, depth)

    out = mlprune_forward(x, params)
    out = jax.block_until_ready(out)

    ref = mlprune_reference(x, params)
    assert out.shape == (batch, 1)
    assert jnp.allclose(out, ref, atol=2e-3, rtol=2e-3), (
        float(jnp.max(jnp.abs(out - ref))))

    print("KERNEL_OK")
</pallas_src>

<mosaic_0001>
module attributes {stable_mosaic.version = 11 : i64} {
  func.func @kernel(%arg0: i32, %arg1: memref<128x128xbf16, #tpu.memory_space<vmem>>, %arg2: memref<128x128xbf16, #tpu.memory_space<vmem>>, %arg3: memref<1x128xf32, #tpu.memory_space<vmem>>, %arg4: memref<128x128xbf16, #tpu.memory_space<vmem>>, %arg5: memref<1x128xf32, #tpu.memory_space<vmem>>, %arg6: memref<128x128xbf16, #tpu.memory_space<vmem>>, %arg7: memref<1x128xf32, #tpu.memory_space<vmem>>, %arg8: memref<1x128xbf16, #tpu.memory_space<vmem>>, %arg9: memref<1x128xf32, #tpu.memory_space<vmem>>, %arg10: memref<128x128xf32, #tpu.memory_space<vmem>>) attributes {dimension_semantics = [#tpu.dimension_semantics<parallel>], iteration_bounds = array<i64: 1>, scalar_prefetch = 0 : i64, scratch_operands = 0 : i64, tpu.core_type = #tpu.core_type<tc>, window_params = [{transform_indices = @transform_0, window_bounds = array<i64: 128, 128>}, {pipeline_mode = #tpu.pipeline_mode<synchronous>, transform_indices = @transform_1, window_bounds = array<i64: 128, 128>}, {pipeline_mode = #tpu.pipeline_mode<synchronous>, transform_indices = @transform_2, window_bounds = array<i64: 1, 128>}, {pipeline_mode = #tpu.pipeline_mode<synchronous>, transform_indices = @transform_3, window_bounds = array<i64: 128, 128>}, {pipeline_mode = #tpu.pipeline_mode<synchronous>, transform_indices = @transform_4, window_bounds = array<i64: 1, 128>}, {pipeline_mode = #tpu.pipeline_mode<synchronous>, transform_indices = @transform_5, window_bounds = array<i64: 128, 128>}, {pipeline_mode = #tpu.pipeline_mode<synchronous>, transform_indices = @transform_6, window_bounds = array<i64: 1, 128>}, {pipeline_mode = #tpu.pipeline_mode<synchronous>, transform_indices = @transform_7, window_bounds = array<i64: 1, 128>}, {pipeline_mode = #tpu.pipeline_mode<synchronous>, transform_indices = @transform_8, window_bounds = array<i64: 1, 128>}, {transform_indices = @transform_9, window_bounds = array<i64: 128, 128>}]} {
    %c0 = arith.constant 0 : index
    %c0_0 = arith.constant 0 : index
    %0 = vector.load %arg1[%c0, %c0_0] : memref<128x128xbf16, #tpu.memory_space<vmem>>, vector<128x128xbf16>
    %c0_1 = arith.constant 0 : index
    %c0_2 = arith.constant 0 : index
    %1 = vector.load %arg2[%c0_1, %c0_2] : memref<128x128xbf16, #tpu.memory_space<vmem>>, vector<128x128xbf16>
    %c0_3 = arith.constant 0 : index
    %c0_4 = arith.constant 0 : index
    %2 = vector.load %arg3[%c0_3, %c0_4] : memref<1x128xf32, #tpu.memory_space<vmem>>, vector<1x128xf32>
    %cst = arith.constant dense<0.000000e+00> : vector<128x128xf32>
    %3 = tpu.matmul %0, %1, %cst {dimension_numbers = #tpu.dot_dimension_numbers<[1], [0], [0], [1], [0, 0, 1, 1], [], []>} : vector<128x128xbf16>, vector<128x128xbf16>, vector<128x128xf32> -> vector<128x128xf32>
    %4 = vector.broadcast %2 : vector<1x128xf32> to vector<128x128xf32>
    %5 = arith.addf %3, %4 : vector<128x128xf32>
    %cst_5 = arith.constant 0.000000e+00 : f32
    %6 = vector.broadcast %cst_5 : f32 to vector<128x128xf32>
    %7 = arith.maximumf %5, %6 : vector<128x128xf32>
    %c0_6 = arith.constant 0 : index
    %c0_7 = arith.constant 0 : index
    %8 = vector.load %arg4[%c0_6, %c0_7] : memref<128x128xbf16, #tpu.memory_space<vmem>>, vector<128x128xbf16>
    %c0_8 = arith.constant 0 : index
    %c0_9 = arith.constant 0 : index
    %9 = vector.load %arg5[%c0_8, %c0_9] : memref<1x128xf32, #tpu.memory_space<vmem>>, vector<1x128xf32>
    %10 = arith.truncf %7 : vector<128x128xf32> to vector<128x128xbf16>
    %cst_10 = arith.constant dense<0.000000e+00> : vector<128x128xf32>
    %11 = tpu.matmul %10, %8, %cst_10 {dimension_numbers = #tpu.dot_dimension_numbers<[1], [0], [0], [1], [0, 0, 1, 1], [], []>} : vector<128x128xbf16>, vector<128x128xbf16>, vector<128x128xf32> -> vector<128x128xf32>
    %12 = vector.broadcast %9 : vector<1x128xf32> to vector<128x128xf32>
    %13 = arith.addf %11, %12 : vector<128x128xf32>
    %cst_11 = arith.constant 0.000000e+00 : f32
    %14 = vector.broadcast %cst_11 : f32 to vector<128x128xf32>
    %15 = arith.maximumf %13, %14 : vector<128x128xf32>
    %c0_12 = arith.constant 0 : index
    %c0_13 = arith.constant 0 : index
    %16 = vector.load %arg6[%c0_12, %c0_13] : memref<128x128xbf16, #tpu.memory_space<vmem>>, vector<128x128xbf16>
    %c0_14 = arith.constant 0 : index
    %c0_15 = arith.constant 0 : index
    %17 = vector.load %arg7[%c0_14, %c0_15] : memref<1x128xf32, #tpu.memory_space<vmem>>, vector<1x128xf32>
    %18 = arith.truncf %15 : vector<128x128xf32> to vector<128x128xbf16>
    %cst_16 = arith.constant dense<0.000000e+00> : vector<128x128xf32>
    %19 = tpu.matmul %18, %16, %cst_16 {dimension_numbers = #tpu.dot_dimension_numbers<[1], [0], [0], [1], [0, 0, 1, 1], [], []>} : vector<128x128xbf16>, vector<128x128xbf16>, vector<128x128xf32> -> vector<128x128xf32>
    %20 = vector.broadcast %17 : vector<1x128xf32> to vector<128x128xf32>
    %21 = arith.addf %19, %20 : vector<128x128xf32>
    %cst_17 = arith.constant 0.000000e+00 : f32
    %22 = vector.broadcast %cst_17 : f32 to vector<128x128xf32>
    %23 = arith.maximumf %21, %22 : vector<128x128xf32>
    %c0_18 = arith.constant 0 : index
    %c0_19 = arith.constant 0 : index
    %24 = vector.load %arg8[%c0_18, %c0_19] : memref<1x128xbf16, #tpu.memory_space<vmem>>, vector<1x128xbf16>
    %25 = arith.extf %24 : vector<1x128xbf16> to vector<1x128xf32>
    %c0_20 = arith.constant 0 : index
    %c0_21 = arith.constant 0 : index
    %26 = vector.load %arg9[%c0_20, %c0_21] : memref<1x128xf32, #tpu.memory_space<vmem>>, vector<1x128xf32>
    %27 = vector.broadcast %25 : vector<1x128xf32> to vector<128x128xf32>
    %28 = arith.mulf %23, %27 : vector<128x128xf32>
    %cst_22 = arith.constant dense<0.000000e+00> : vector<128xf32>
    %29 = vector.multi_reduction <add>, %28, %cst_22 [1] : vector<128x128xf32> to vector<128xf32>
    %30 = vector.shape_cast %29 : vector<128xf32> to vector<128x1xf32>
    %31 = vector.shape_cast %30 : vector<128x1xf32> to vector<128x1xf32>
    %32 = vector.broadcast %31 : vector<128x1xf32> to vector<128x128xf32>
    %33 = vector.broadcast %26 : vector<1x128xf32> to vector<128x128xf32>
    %34 = arith.addf %32, %33 : vector<128x128xf32>
    %cst_23 = arith.constant 0.000000e+00 : f32
    %35 = vector.broadcast %cst_23 : f32 to vector<128x128xf32>
    %36 = arith.maximumf %34, %35 : vector<128x128xf32>
    %c0_24 = arith.constant 0 : index
    %c0_25 = arith.constant 0 : index
    %37 = vector.load %arg10[%c0_24, %c0_25] : memref<128x128xf32, #tpu.memory_space<vmem>>, vector<128x128xf32>
    tpu.vector_store %arg10[%c0_24, %c0_25], %36 {strides = array<i32>} : memref<128x128xf32, #tpu.memory_space<vmem>>, vector<128x128xf32>,
    return
  }
  func.func @transform_0(%arg0: i32) -> (i32, i32) {
    %c0_i32 = arith.constant 0 : i32
    %c0_i32_0 = arith.constant 0 : i32
    return %arg0, %c0_i32 : i32, i32
  }
  func.func @transform_1(%arg0: i32) -> (i32, i32) {
    %c0_i32 = arith.constant 0 : i32
    %c0_i32_0 = arith.constant 0 : i32
    %c0_i32_1 = arith.constant 0 : i32
    return %c0_i32, %c0_i32_0 : i32, i32
  }
  func.func @transform_2(%arg0: i32) -> (i32, i32) {
    %c0_i32 = arith.constant 0 : i32
    %c0_i32_0 = arith.constant 0 : i32
    %c0_i32_1 = arith.constant 0 : i32
    return %c0_i32, %c0_i32_0 : i32, i32
  }
  func.func @transform_3(%arg0: i32) -> (i32, i32) {
    %c0_i32 = arith.constant 0 : i32
    %c0_i32_0 = arith.constant 0 : i32
    %c0_i32_1 = arith.constant 0 : i32
    return %c0_i32, %c0_i32_0 : i32, i32
  }
  func.func @transform_4(%arg0: i32) -> (i32, i32) {
    %c0_i32 = arith.constant 0 : i32
    %c0_i32_0 = arith.constant 0 : i32
    %c0_i32_1 = arith.constant 0 : i32
    return %c0_i32, %c0_i32_0 : i32, i32
  }
  func.func @transform_5(%arg0: i32) -> (i32, i32) {
    %c0_i32 = arith.constant 0 : i32
    %c0_i32_0 = arith.constant 0 : i32
    %c0_i32_1 = arith.constant 0 : i32
    return %c0_i32, %c0_i32_0 : i32, i32
  }
  func.func @transform_6(%arg0: i32) -> (i32, i32) {
    %c0_i32 = arith.constant 0 : i32
    %c0_i32_0 = arith.constant 0 : i32
    %c0_i32_1 = arith.constant 0 : i32
    return %c0_i32, %c0_i32_0 : i32, i32
  }
  func.func @transform_7(%arg0: i32) -> (i32, i32) {
    %c0_i32 = arith.constant 0 : i32
    %c0_i32_0 = arith.constant 0 : i32
    %c0_i32_1 = arith.constant 0 : i32
    return %c0_i32, %c0_i32_0 : i32, i32
  }
  func.func @transform_8(%arg0: i32) -> (i32, i32) {
    %c0_i32 = arith.constant 0 : i32
    %c0_i32_0 = arith.constant 0 : i32
    %c0_i32_1 = arith.constant 0 : i32
    return %c0_i32, %c0_i32_0 : i32, i32
  }
  func.func @transform_9(%arg0: i32) -> (i32, i32) {
    %c0_i32 = arith.constant 0 : i32
    %c0_i32_0 = arith.constant 0 : i32
    return %arg0, %c0_i32 : i32, i32
  }
}

</mosaic_0001>

<llo_original>
// kernel: tpu_custom_call.1
$region0: #{tpu_custom_call.1}
  #allocation0 [shape = 'u32[]', space=smem, size = 0x4, offset = 0x4, fixed_abs, tag = 'smem constant byte address 0x4 - core index']
  #allocation1 [shape = 'u32[144,128]{1,0:T(1,128)}', space=vmem, size = 0x12000, scoped, tag = 'internal scratch']
  %s0 = inlined_call_operand.hbm [shape: bf16[128,128], index: 0, kind: input, shape index: {}]
  %s1 = inlined_call_operand.hbm [shape: bf16[128,128], index: 1, kind: input, shape index: {}]
  %s2 = inlined_call_operand.vmem [shape: f32[1,128], index: 2, kind: input, shape index: {}]
  %s3 = inlined_call_operand.hbm [shape: bf16[128,128], index: 3, kind: input, shape index: {}]
  %s4 = inlined_call_operand.vmem [shape: f32[1,128], index: 4, kind: input, shape index: {}]
  %s5 = inlined_call_operand.hbm [shape: bf16[128,128], index: 5, kind: input, shape index: {}]
  %s6 = inlined_call_operand.vmem [shape: f32[1,128], index: 6, kind: input, shape index: {}]
  %s7 = inlined_call_operand.vmem [shape: bf16[1,128], index: 7, kind: input, shape index: {}]
  %s8 = inlined_call_operand.vmem [shape: f32[1,128], index: 8, kind: input, shape index: {}]
  %s9 = inlined_call_operand.hbm [shape: f32[128,128], index: 9, kind: output, shape index: {}]
  %s10 = sld [smem:[#allocation0]]
  $region62: #{tpu_custom_call.1} parent=0
    _
  %s12 = ssub.s32 1, %s10
  %s13 = scalar_select 0, %s12, %s10
  $region1: #{tpu_custom_call.1} parent=0
    #allocation2 [shape = 'u8[32768]{0}', space=vmem, size = 0x8000, scoped, tag = 'input window, operand 0, single buffered']
    #allocation3 [shape = 's32[1]{0}', space=sflag, size = 0x4, scoped, tag = 'scoped memory for tpu_custom_call.1']
    #allocation4 [shape = 's32[1]{0}', space=sflag, size = 0x4, scoped, tag = 'scoped memory for tpu_custom_call.1']
    #allocation5 [shape = 'u8[32768]{0}', space=vmem, size = 0x8000, scoped, tag = 'input window, operand 1, single buffered']
    #allocation6 [shape = 's32[1]{0}', space=sflag, size = 0x4, scoped, tag = 'scoped memory for tpu_custom_call.1']
    #allocation7 [shape = 'u8[32768]{0}', space=vmem, size = 0x8000, scoped, tag = 'input window, operand 3, single buffered']
    #allocation8 [shape = 'u8[32768]{0}', space=vmem, size = 0x8000, scoped, tag = 'input window, operand 5, single buffered']
    #allocation9 [shape = 's32[1]{0}', space=sflag, size = 0x4, scoped, tag = 'scoped memory for tpu_custom_call.1']
    #allocation10 [shape = 'u8[65536]{0}', space=vmem, size = 0x10000, scoped, tag = 'output window, operand 0, single buffered']
    %14 = vsyncpa [#allocation3], 0
    %15 = vsyncpa [#allocation6], 0
    %16 = vsyncpa [#allocation9], 0
    %17 = vsyncpa [#allocation4], 0
    // Predicated region
    $region2: #{tpu_custom_call.1} parent=1 // pred_check
      _
    $region3: #{tpu_custom_call.1} parent=1 // pred_check_branch
      %19 = sbr.rel (0) target = $region5
    $region4: #{tpu_custom_call.1} parent=1 // pred_region
      %s21 = ssub.s32 1024, 1024
      %22 = vsyncadd [#allocation3], %s21
      %s23 = sshll.u32 [#allocation2], 4
      %s24 = int_to_ptr.vmem [resolvable:$true] %s23
      %29 = dma.hbm_to_vmem [thread:$0]  %s0, 1024, %s24, [#allocation3], 64, 64, 4
    $region5: #{tpu_custom_call.1} parent=1 // pred_fallthru
      _
    // Predicated region
    $region6: #{tpu_custom_call.1} parent=1 // pred_check
      _
    $region7: #{tpu_custom_call.1} parent=1 // pred_check_branch
      %31 = sbr.rel (0) target = $region9
    $region8: #{tpu_custom_call.1} parent=1 // pred_region
      %s33 = ssub.s32 1024, 1024
      %34 = vsyncadd [#allocation6], %s33
      %s35 = sshll.u32 [#allocation5], 4
      %s36 = int_to_ptr.vmem [resolvable:$true] %s35
      %41 = dma.hbm_to_vmem [thread:$0]  %s1, 1024, %s36, [#allocation6], 64, 64, 4
    $region9: #{tpu_custom_call.1} parent=1 // pred_fallthru
      _
    // Predicated region
    $region10: #{tpu_custom_call.1} parent=1 // pred_check
      _
    $region11: #{tpu_custom_call.1} parent=1 // pred_check_branch
      %43 = sbr.rel (0) target = $region13
    $region12: #{tpu_custom_call.1} parent=1 // pred_region
      _
    $region13: #{tpu_custom_call.1} parent=1 // pred_fallthru
      _
    // Predicated region
    $region14: #{tpu_custom_call.1} parent=1 // pred_check
      _
    $region15: #{tpu_custom_call.1} parent=1 // pred_check_branch
      %45 = sbr.rel (0) target = $region17
    $region16: #{tpu_custom_call.1} parent=1 // pred_region
      %s47 = ssub.s32 1024, 1024
      %48 = vsyncadd [#allocation6], %s47
      %s49 = sshll.u32 [#allocation7], 4
      %s50 = int_to_ptr.vmem [resolvable:$true] %s49
      %55 = dma.hbm_to_vmem [thread:$0]  %s3, 1024, %s50, [#allocation6], 64, 64, 4
    $region17: #{tpu_custom_call.1} parent=1 // pred_fallthru
      _
    // Predicated region
    $region18: #{tpu_custom_call.1} parent=1 // pred_check
      _
    $region19: #{tpu_custom_call.1} parent=1 // pred_check_branch
      %57 = sbr.rel (0) target = $region21
    $region20: #{tpu_custom_call.1} parent=1 // pred_region
      _
    $region21: #{tpu_custom_call.1} parent=1 // pred_fallthru
      _
    // Predicated region
    $region22: #{tpu_custom_call.1} parent=1 // pred_check
      _
    $region23: #{tpu_custom_call.1} parent=1 // pred_check_branch
      %59 = sbr.rel (0) target = $region25
    $region24: #{tpu_custom_call.1} parent=1 // pred_region
      %s61 = ssub.s32 1024, 1024
      %62 = vsyncadd [#allocation9], %s61
      %s63 = sshll.u32 [#allocation8], 4
      %s64 = int_to_ptr.vmem [resolvable:$true] %s63
      %69 = dma.hbm_to_vmem [thread:$0]  %s5, 1024, %s64, [#allocation9], 64, 64, 4
    $region25: #{tpu_custom_call.1} parent=1 // pred_fallthru
      _
    // Predicated region
    $region26: #{tpu_custom_call.1} parent=1 // pred_check
      _
    $region27: #{tpu_custom_call.1} parent=1 // pred_check_branch
      %71 = sbr.rel (0) target = $region29
    $region28: #{tpu_custom_call.1} parent=1 // pred_region
      _
    $region29: #{tpu_custom_call.1} parent=1 // pred_fallthru
      _
    // Predicated region
    $region30: #{tpu_custom_call.1} parent=1 // pred_check
      _
    $region31: #{tpu_custom_call.1} parent=1 // pred_check_branch
      %73 = sbr.rel (0) target = $region33
    $region32: #{tpu_custom_call.1} parent=1 // pred_region
      _
    $region33: #{tpu_custom_call.1} parent=1 // pred_fallthru
      _
    // Predicated region
    $region34: #{tpu_custom_call.1} parent=1 // pred_check
      _
    $region35: #{tpu_custom_call.1} parent=1 // pred_check_branch
      %75 = sbr.rel (0) target = $region37
    $region36: #{tpu_custom_call.1} parent=1 // pred_region
      _
    $region37: #{tpu_custom_call.1} parent=1 // pred_fallthru
      _
    // Predicated region
    $region38: #{tpu_custom_call.1} parent=1 // pred_check
      _
    $region39: #{tpu_custom_call.1} parent=1 // pred_check_branch
      %77 = sbr.rel (0) target = $region41
    $region40: #{tpu_custom_call.1} parent=1 // pred_region
      %78 = dma.done [#allocation3], 1024
    $region41: #{tpu_custom_call.1} parent=1 // pred_fallthru
      _
    // Predicated region
    $region42: #{tpu_custom_call.1} parent=1 // pred_check
      _
    $region43: #{tpu_custom_call.1} parent=1 // pred_check_branch
      %80 = sbr.rel (0) target = $region45
    $region44: #{tpu_custom_call.1} parent=1 // pred_region
      %81 = dma.done [#allocation6], 1024
    $region45: #{tpu_custom_call.1} parent=1 // pred_fallthru
      _
    // Predicated region
    $region46: #{tpu_custom_call.1} parent=1 // pred_check
      _
    $region47: #{tpu_custom_call.1} parent=1 // pred_check_branch
      %83 = sbr.rel (0) target = $region49
    $region48: #{tpu_custom_call.1} parent=1 // pred_region
      %84 = dma.done [#allocation6], 1024
    $region49: #{tpu_custom_call.1} parent=1 // pred_fallthru
      _
    // Predicated region
    $region50: #{tpu_custom_call.1} parent=1 // pred_check
      _
    $region51: #{tpu_custom_call.1} parent=1 // pred_check_branch
      %86 = sbr.rel (0) target = $region53
    $region52: #{tpu_custom_call.1} parent=1 // pred_region
      %87 = dma.done [#allocation9], 1024
    $region53: #{tpu_custom_call.1} parent=1 // pred_fallthru
      _
    %v89 = vld [vmem:[#allocation2] sm:$0xf]
    %v90 = vld [vmem:[#allocation2 + $0x4] sm:$0xf]
    %v91 = vld [vmem:[#allocation2 + $0x8] sm:$0xf]
    %v92 = vld [vmem:[#allocation2 + $0xc] sm:$0xf]
    %v93 = vld [vmem:[#allocation2 + $0x10] sm:$0xf]
    %v94 = vld [vmem:[#allocation2 + $0x14] sm:$0xf]
    %v95 = vld [vmem:[#allocation2 + $0x18] sm:$0xf]
    %v96 = vld [vmem:[#allocation2 + $0x1c] sm:$0xf]
    %v97 = vld [vmem:[#allocation2 + $0x20] sm:$0xf]
    %v98 = vld [vmem:[#allocation2 + $0x24] sm:$0xf]
    %v99 = vld [vmem:[#allocation2 + $0x28] sm:$0xf]
    %v100 = vld [vmem:[#allocation2 + $0x2c] sm:$0xf]
    %v101 = vld [vmem:[#allocation2 + $0x30] sm:$0xf]
    %v102 = vld [vmem:[#allocation2 + $0x34] sm:$0xf]
    %v103 = vld [vmem:[#allocation2 + $0x38] sm:$0xf]
    %v104 = vld [vmem:[#allocation2 + $0x3c] sm:$0xf]
    %v105 = vld [vmem:[#allocation5] sm:$0xf]
    %v106 = vld [vmem:[#allocation5 + $0x4] sm:$0xf]
    %v107 = vld [vmem:[#allocation5 + $0x8] sm:$0xf]
    %v108 = vld [vmem:[#allocation5 + $0xc] sm:$0xf]
    %v109 = vld [vmem:[#allocation5 + $0x10] sm:$0xf]
    %v110 = vld [vmem:[#allocation5 + $0x14] sm:$0xf]
    %v111 = vld [vmem:[#allocation5 + $0x18] sm:$0xf]
    %v112 = vld [vmem:[#allocation5 + $0x1c] sm:$0xf]
    %v113 = vld [vmem:[#allocation5 + $0x20] sm:$0xf]
    %v114 = vld [vmem:[#allocation5 + $0x24] sm:$0xf]
    %v115 = vld [vmem:[#allocation5 + $0x28] sm:$0xf]
    %v116 = vld [vmem:[#allocation5 + $0x2c] sm:$0xf]
    %v117 = vld [vmem:[#allocation5 + $0x30] sm:$0xf]
    %v118 = vld [vmem:[#allocation5 + $0x34] sm:$0xf]
    %v119 = vld [vmem:[#allocation5 + $0x38] sm:$0xf]
    %v120 = vld [vmem:[#allocation5 + $0x3c] sm:$0xf]
    %v121 = vld [vmem:[%s2] sm:$0x1]
    %v123 = vlaneseq
    %v124 = vshrl.u32 %v123, 7
    %v125 = vsub.s32 0, %v124
    %v126 = vrot.slane %v121, %v125
    %v144 = vunpack.c.l.b16 %v89
    %v145 = vunpack.c.l.b16 %v90
    %v146 = vunpack.c.l.b16 %v91
    %v147 = vunpack.c.l.b16 %v92
    %v148 = vunpack.c.l.b16 %v93
    %v149 = vunpack.c.l.b16 %v94
    %v150 = vunpack.c.l.b16 %v95
    %v151 = vunpack.c.l.b16 %v96
    %v152 = vunpack.c.l.b16 %v97
    %v153 = vunpack.c.l.b16 %v98
    %v154 = vunpack.c.l.b16 %v99
    %v155 = vunpack.c.l.b16 %v100
    %v156 = vunpack.c.l.b16 %v101
    %v157 = vunpack.c.l.b16 %v102
    %v158 = vunpack.c.l.b16 %v103
    %v159 = vunpack.c.l.b16 %v104
    %v160 = vpack.c.b16 %v145, %v144
    %v161 = vpack.c.b16 %v147, %v146
    %v162 = vpack.c.b16 %v149, %v148
    %v163 = vpack.c.b16 %v151, %v150
    %v164 = vpack.c.b16 %v153, %v152
    %v165 = vpack.c.b16 %v155, %v154
    %v166 = vpack.c.b16 %v157, %v156
    %v167 = vpack.c.b16 %v159, %v158
    %v192 = vunpack.c.l.b16 %v105
    %v193 = vunpack.c.l.b16 %v106
    %v194 = vunpack.c.l.b16 %v107
    %v195 = vunpack.c.l.b16 %v108
    %v196 = vunpack.c.l.b16 %v109
    %v197 = vunpack.c.l.b16 %v110
    %v198 = vunpack.c.l.b16 %v111
    %v199 = vunpack.c.l.b16 %v112
    %v200 = vunpack.c.l.b16 %v113
    %v201 = vunpack.c.l.b16 %v114
    %v202 = vunpack.c.l.b16 %v115
    %v203 = vunpack.c.l.b16 %v116
    %v204 = vunpack.c.l.b16 %v117
    %v205 = vunpack.c.l.b16 %v118
    %v206 = vunpack.c.l.b16 %v119
    %v207 = vunpack.c.l.b16 %v120
    %v208 = vpack.c.b16 %v193, %v192
    %v209 = vpack.c.b16 %v195, %v194
    %v210 = vpack.c.b16 %v197, %v196
    %v211 = vpack.c.b16 %v199, %v198
    %v212 = vpack.c.b16 %v201, %v200
    %v213 = vpack.c.b16 %v203, %v202
    %v214 = vpack.c.b16 %v205, %v204
    %v215 = vpack.c.b16 %v207, %v206
    %224 = vmatprep.subr.bf16.mxu0 0
    %225 = vmatpush1.bf16.msra.mxu0 %v208
    %226 = vmatprep.subr.bf16.mxu0 0
    %227 = vmatpush1.bf16.msra.mxu0 %v209
    %228 = vmatprep.subr.bf16.mxu0 0
    %229 = vmatpush1.bf16.msra.mxu0 %v210
    %230 = vmatprep.subr.bf16.mxu0 0
    %231 = vmatpush1.bf16.msra.mxu0 %v211
    %232 = vmatprep.subr.bf16.mxu0 0
    %233 = vmatpush1.bf16.msra.mxu0 %v212
    %234 = vmatprep.subr.bf16.mxu0 0
    %235 = vmatpush1.bf16.msra.mxu0 %v213
    %236 = vmatprep.subr.bf16.mxu0 0
    %237 = vmatpush1.bf16.msra.mxu0 %v214
    %238 = vmatprep.subr.bf16.mxu0 0
    %239 = vmatpush1.bf16.msra.mxu0 %v215
    %240 = vmatprep.subr.bf16.mxu0 0
    %241 = vmatpush1.bf16.msra.mxu0 0
    %242 = vmatprep.subr.bf16.mxu0 0
    %243 = vmatpush1.bf16.msra.mxu0 0
    %244 = vmatprep.subr.bf16.mxu0 0
    %245 = vmatpush1.bf16.msra.mxu0 0
    %246 = vmatprep.subr.bf16.mxu0 0
    %247 = vmatpush1.bf16.msra.mxu0 0
    %248 = vmatprep.subr.bf16.mxu0 0
    %249 = vmatpush1.bf16.msra.mxu0 0
    %250 = vmatprep.subr.bf16.mxu0 0
    %251 = vmatpush1.bf16.msra.mxu0 0
    %252 = vmatprep.subr.bf16.mxu0 0
    %253 = vmatpush1.bf16.msra.mxu0 0
    %254 = vmatprep.subr.bf16.mxu0 0
    %255 = vmatpush1.bf16.msra.mxu0 0
    %256 = vmatprep.mubr.bf16.mxu0 0
    %257 = vmatmul.mubr.bf16.gmra.mrb[0].mxu0 %v160
    %v258 = vpop.f32.mrb[0].mxu0
    %v259 = vadd.f32 %v126, %v258
    %v260 = vpop.f32.mrb[0].mxu0
    %v261 = vpop.f32.mrb[0].mxu0
    %v262 = vadd.f32 %v126, %v261
    %v263 = vpop.f32.mrb[0].mxu0
    %264 = vmatprep.mubr.bf16.mxu0 0
    %265 = vmatmul.mubr.bf16.gmra.mrb[0].mxu0 %v161
    %v266 = vpop.f32.mrb[0].mxu0
    %v267 = vadd.f32 %v126, %v266
    %v268 = vpop.f32.mrb[0].mxu0
    %v269 = vpop.f32.mrb[0].mxu0
    %v270 = vadd.f32 %v126, %v269
    %v271 = vpop.f32.mrb[0].mxu0
    %272 = vmatprep.mubr.bf16.mxu0 0
    %273 = vmatmul.mubr.bf16.gmra.mrb[0].mxu0 %v162
    %v274 = vpop.f32.mrb[0].mxu0
    %v275 = vadd.f32 %v126, %v274
    %v276 = vpop.f32.mrb[0].mxu0
    %v277 = vpop.f32.mrb[0].mxu0
    %v278 = vadd.f32 %v126, %v277
    %v279 = vpop.f32.mrb[0].mxu0
    %280 = vmatprep.mubr.bf16.mxu0 0
    %281 = vmatmul.mubr.bf16.gmra.mrb[0].mxu0 %v163
    %v282 = vpop.f32.mrb[0].mxu0
    %v283 = vadd.f32 %v126, %v282
    %v284 = vpop.f32.mrb[0].mxu0
    %v285 = vpop.f32.mrb[0].mxu0
    %v286 = vadd.f32 %v126, %v285
    %v287 = vpop.f32.mrb[0].mxu0
    %288 = vmatprep.mubr.bf16.mxu0 0
    %289 = vmatmul.mubr.bf16.gmra.mrb[0].mxu0 %v164
    %v290 = vpop.f32.mrb[0].mxu0
    %v291 = vadd.f32 %v126, %v290
    %v292 = vpop.f32.mrb[0].mxu0
    %v293 = vpop.f32.mrb[0].mxu0
    %v294 = vadd.f32 %v126, %v293
    %v295 = vpop.f32.mrb[0].mxu0
    %296 = vmatprep.mubr.bf16.mxu0 0
    %297 = vmatmul.mubr.bf16.gmra.mrb[0].mxu0 %v165
    %v298 = vpop.f32.mrb[0].mxu0
    %v299 = vadd.f32 %v126, %v298
    %v300 = vpop.f32.mrb[0].mxu0
    %v301 = vpop.f32.mrb[0].mxu0
    %v302 = vadd.f32 %v126, %v301
    %v303 = vpop.f32.mrb[0].mxu0
    %304 = vmatprep.mubr.bf16.mxu0 0
    %305 = vmatmul.mubr.bf16.gmra.mrb[0].mxu0 %v166
    %v306 = vpop.f32.mrb[0].mxu0
    %v307 = vadd.f32 %v126, %v306
    %v308 = vpop.f32.mrb[0].mxu0
    %v309 = vpop.f32.mrb[0].mxu0
    %v310 = vadd.f32 %v126, %v309
    %v311 = vpop.f32.mrb[0].mxu0
    %312 = vmatprep.mubr.bf16.mxu0 0
    %313 = vmatmul.mubr.bf16.gmra.mrb[0].mxu0 %v167
    %v314 = vpop.f32.mrb[0].mxu0
    %v315 = vadd.f32 %v126, %v314
    %v316 = vpop.f32.mrb[0].mxu0
    %v317 = vpop.f32.mrb[0].mxu0
    %v318 = vadd.f32 %v126, %v317
    %v319 = vpop.f32.mrb[0].mxu0
    %320 = vdwg.mxu0
    %v321 = vmax.f32 %v259, 0.0
    %v322 = vmax.f32 %v262, 0.0
    %v323 = vmax.f32 %v267, 0.0
    %v324 = vmax.f32 %v270, 0.0
    %v325 = vmax.f32 %v275, 0.0
    %v326 = vmax.f32 %v278, 0.0
    %v327 = vmax.f32 %v283, 0.0
    %v328 = vmax.f32 %v286, 0.0
    %v329 = vmax.f32 %v291, 0.0
    %v330 = vmax.f32 %v294, 0.0
    %v331 = vmax.f32 %v299, 0.0
    %v332 = vmax.f32 %v302, 0.0
    %v333 = vmax.f32 %v307, 0.0
    %v334 = vmax.f32 %v310, 0.0
    %v335 = vmax.f32 %v315, 0.0
    %v336 = vmax.f32 %v318, 0.0
    %v337 = vld [vmem:[#allocation7] sm:$0xf]
    %v338 = vld [vmem:[#allocation7 + $0x4] sm:$0xf]
    %v339 = vld [vmem:[#allocation7 + $0x8] sm:$0xf]
    %v340 = vld [vmem:[#allocation7 + $0xc] sm:$0xf]
    %v341 = vld [vmem:[#allocation7 + $0x10] sm:$0xf]
    %v342 = vld [vmem:[#allocation7 + $0x14] sm:$0xf]
    %v343 = vld [vmem:[#allocation7 + $0x18] sm:$0xf]
    %v344 = vld [vmem:[#allocation7 + $0x1c] sm:$0xf]
    %v345 = vld [vmem:[#allocation7 + $0x20] sm:$0xf]
    %v346 = vld [vmem:[#allocation7 + $0x24] sm:$0xf]
    %v347 = vld [vmem:[#allocation7 + $0x28] sm:$0xf]
    %v348 = vld [vmem:[#allocation7 + $0x2c] sm:$0xf]
    %v349 = vld [vmem:[#allocation7 + $0x30] sm:$0xf]
    %v350 = vld [vmem:[#allocation7 + $0x34] sm:$0xf]
    %v351 = vld [vmem:[#allocation7 + $0x38] sm:$0xf]
    %v352 = vld [vmem:[#allocation7 + $0x3c] sm:$0xf]
    %v353 = vld [vmem:[%s4] sm:$0x1]
    %v354 = vpack.c.bf16 %v322, %v321
    %v355 = vpack.c.bf16 %v324, %v323
    %v356 = vpack.c.bf16 %v326, %v325
    %v357 = vpack.c.bf16 %v328, %v327
    %v358 = vpack.c.bf16 %v330, %v329
    %v359 = vpack.c.bf16 %v332, %v331
    %v360 = vpack.c.bf16 %v334, %v333
    %v361 = vpack.c.bf16 %v336, %v335
    %v363 = vlaneseq
    %v364 = vshrl.u32 %v363, 7
    %v365 = vsub.s32 0, %v364
    %v366 = vrot.slane %v353, %v365
    %v384 = vunpack.c.l.b16 %v337
    %v385 = vunpack.c.l.b16 %v338
    %v386 = vunpack.c.l.b16 %v339
    %v387 = vunpack.c.l.b16 %v340
    %v388 = vunpack.c.l.b16 %v341
    %v389 = vunpack.c.l.b16 %v342
    %v390 = vunpack.c.l.b16 %v343
    %v391 = vunpack.c.l.b16 %v344
    %v392 = vunpack.c.l.b16 %v345
    %v393 = vunpack.c.l.b16 %v346
    %v394 = vunpack.c.l.b16 %v347
    %v395 = vunpack.c.l.b16 %v348
    %v396 = vunpack.c.l.b16 %v349
    %v397 = vunpack.c.l.b16 %v350
    %v398 = vunpack.c.l.b16 %v351
    %v399 = vunpack.c.l.b16 %v352
    %v400 = vpack.c.b16 %v385, %v384
    %v401 = vpack.c.b16 %v387, %v386
    %v402 = vpack.c.b16 %v389, %v388
    %v403 = vpack.c.b16 %v391, %v390
    %v404 = vpack.c.b16 %v393, %v392
    %v405 = vpack.c.b16 %v395, %v394
    %v406 = vpack.c.b16 %v397, %v396
    %v407 = vpack.c.b16 %v399, %v398
    %416 = vmatprep.subr.bf16.mxu0 0
    %417 = vmatpush1.bf16.msra.mxu0 %v400
    %418 = vmatprep.subr.bf16.mxu0 0
    %419 = vmatpush1.bf16.msra.mxu0 %v401
    %420 = vmatprep.subr.bf16.mxu0 0
    %421 = vmatpush1.bf16.msra.mxu0 %v402
    %422 = vmatprep.subr.bf16.mxu0 0
    %423 = vmatpush1.bf16.msra.mxu0 %v403
    %424 = vmatprep.subr.bf16.mxu0 0
    %425 = vmatpush1.bf16.msra.mxu0 %v404
    %426 = vmatprep.subr.bf16.mxu0 0
    %427 = vmatpush1.bf16.msra.mxu0 %v405
    %428 = vmatprep.subr.bf16.mxu0 0
    %429 = vmatpush1.bf16.msra.mxu0 %v406
    %430 = vmatprep.subr.bf16.mxu0 0
    %431 = vmatpush1.bf16.msra.mxu0 %v407
    %432 = vmatprep.subr.bf16.mxu0 0
    %433 = vmatpush1.bf16.msra.mxu0 0
    %434 = vmatprep.subr.bf16.mxu0 0
    %435 = vmatpush1.bf16.msra.mxu0 0
    %436 = vmatprep.subr.bf16.mxu0 0
    %437 = vmatpush1.bf16.msra.mxu0 0
    %438 = vmatprep.subr.bf16.mxu0 0
    %439 = vmatpush1.bf16.msra.mxu0 0
    %440 = vmatprep.subr.bf16.mxu0 0
    %441 = vmatpush1.bf16.msra.mxu0 0
    %442 = vmatprep.subr.bf16.mxu0 0
    %443 = vmatpush1.bf16.msra.mxu0 0
    %444 = vmatprep.subr.bf16.mxu0 0
    %445 = vmatpush1.bf16.msra.mxu0 0
    %446 = vmatprep.subr.bf16.mxu0 0
    %447 = vmatpush1.bf16.msra.mxu0 0
    %448 = vmatprep.mubr.bf16.mxu0 0
    %449 = vmatmul.mubr.bf16.gmra.mrb[0].mxu0 %v354
    %v450 = vpop.f32.mrb[0].mxu0
    %v451 = vadd.f32 %v366, %v450
    %v452 = vpop.f32.mrb[0].mxu0
    %v453 = vpop.f32.mrb[0].mxu0
    %v454 = vadd.f32 %v366, %v453
    %v455 = vpop.f32.mrb[0].mxu0
    %456 = vmatprep.mubr.bf16.mxu0 0
    %457 = vmatmul.mubr.bf16.gmra.mrb[0].mxu0 %v355
    %v458 = vpop.f32.mrb[0].mxu0
    %v459 = vadd.f32 %v366, %v458
    %v460 = vpop.f32.mrb[0].mxu0
    %v461 = vpop.f32.mrb[0].mxu0
    %v462 = vadd.f32 %v366, %v461
    %v463 = vpop.f32.mrb[0].mxu0
    %464 = vmatprep.mubr.bf16.mxu0 0
    %465 = vmatmul.mubr.bf16.gmra.mrb[0].mxu0 %v356
    %v466 = vpop.f32.mrb[0].mxu0
    %v467 = vadd.f32 %v366, %v466
    %v468 = vpop.f32.mrb[0].mxu0
    %v469 = vpop.f32.mrb[0].mxu0
    %v470 = vadd.f32 %v366, %v469
    %v471 = vpop.f32.mrb[0].mxu0
    %472 = vmatprep.mubr.bf16.mxu0 0
    %473 = vmatmul.mubr.bf16.gmra.mrb[0].mxu0 %v357
    %v474 = vpop.f32.mrb[0].mxu0
    %v475 = vadd.f32 %v366, %v474
    %v476 = vpop.f32.mrb[0].mxu0
    %v477 = vpop.f32.mrb[0].mxu0
    %v478 = vadd.f32 %v366, %v477
    %v479 = vpop.f32.mrb[0].mxu0
    %480 = vmatprep.mubr.bf16.mxu0 0
    %481 = vmatmul.mubr.bf16.gmra.mrb[0].mxu0 %v358
    %v482 = vpop.f32.mrb[0].mxu0
    %v483 = vadd.f32 %v366, %v482
    %v484 = vpop.f32.mrb[0].mxu0
    %v485 = vpop.f32.mrb[0].mxu0
    %v486 = vadd.f32 %v366, %v485
    %v487 = vpop.f32.mrb[0].mxu0
    %488 = vmatprep.mubr.bf16.mxu0 0
    %489 = vmatmul.mubr.bf16.gmra.mrb[0].mxu0 %v359
    %v490 = vpop.f32.mrb[0].mxu0
    %v491 = vadd.f32 %v366, %v490
    %v492 = vpop.f32.mrb[0].mxu0
    %v493 = vpop.f32.mrb[0].mxu0
    %v494 = vadd.f32 %v366, %v493
    %v495 = vpop.f32.mrb[0].mxu0
    %496 = vmatprep.mubr.bf16.mxu0 0
    %497 = vmatmul.mubr.bf16.gmra.mrb[0].mxu0 %v360
    %v498 = vpop.f32.mrb[0].mxu0
    %v499 = vadd.f32 %v366, %v498
    %v500 = vpop.f32.mrb[0].mxu0
    %v501 = vpop.f32.mrb[0].mxu0
    %v502 = vadd.f32 %v366, %v501
    %v503 = vpop.f32.mrb[0].mxu0
    %504 = vmatprep.mubr.bf16.mxu0 0
    %505 = vmatmul.mubr.bf16.gmra.mrb[0].mxu0 %v361
    %v506 = vpop.f32.mrb[0].mxu0
    %v507 = vadd.f32 %v366, %v506
    %v508 = vpop.f32.mrb[0].mxu0
    %v509 = vpop.f32.mrb[0].mxu0
    %v510 = vadd.f32 %v366, %v509
    %v511 = vpop.f32.mrb[0].mxu0
    %512 = vdwg.mxu0
    %v513 = vmax.f32 %v451, 0.0
    %v514 = vmax.f32 %v454, 0.0
    %v515 = vmax.f32 %v459, 0.0
    %v516 = vmax.f32 %v462, 0.0
    %v517 = vmax.f32 %v467, 0.0
    %v518 = vmax.f32 %v470, 0.0
    %v519 = vmax.f32 %v475, 0.0
    %v520 = vmax.f32 %v478, 0.0
    %v521 = vmax.f32 %v483, 0.0
    %v522 = vmax.f32 %v486, 0.0
    %v523 = vmax.f32 %v491, 0.0
    %v524 = vmax.f32 %v494, 0.0
    %v525 = vmax.f32 %v499, 0.0
    %v526 = vmax.f32 %v502, 0.0
    %v527 = vmax.f32 %v507, 0.0
    %v528 = vmax.f32 %v510, 0.0
    %v529 = vld [vmem:[#allocation8] sm:$0xf]
    %v530 = vld [vmem:[#allocation8 + $0x4] sm:$0xf]
    %v531 = vld [vmem:[#allocation8 + $0x8] sm:$0xf]
    %v532 = vld [vmem:[#allocation8 + $0xc] sm:$0xf]
    %v533 = vld [vmem:[#allocation8 + $0x10] sm:$0xf]
    %v534 = vld [vmem:[#allocation8 + $0x14] sm:$0xf]
    %v535 = vld [vmem:[#allocation8 + $0x18] sm:$0xf]
    %v536 = vld [vmem:[#allocation8 + $0x1c] sm:$0xf]
    %v537 = vld [vmem:[#allocation8 + $0x20] sm:$0xf]
    %v538 = vld [vmem:[#allocation8 + $0x24] sm:$0xf]
    %v539 = vld [vmem:[#allocation8 + $0x28] sm:$0xf]
    %v540 = vld [vmem:[#allocation8 + $0x2c] sm:$0xf]
    %v541 = vld [vmem:[#allocation8 + $0x30] sm:$0xf]
    %v542 = vld [vmem:[#allocation8 + $0x34] sm:$0xf]
    %v543 = vld [vmem:[#allocation8 + $0x38] sm:$0xf]
    %v544 = vld [vmem:[#allocation8 + $0x3c] sm:$0xf]
    %v545 = vld [vmem:[%s6] sm:$0x1]
    %v546 = vpack.c.bf16 %v514, %v513
    %v547 = vpack.c.bf16 %v516, %v515
    %v548 = vpack.c.bf16 %v518, %v517
    %v549 = vpack.c.bf16 %v520, %v519
    %v550 = vpack.c.bf16 %v522, %v521
    %v551 = vpack.c.bf16 %v524, %v523
    %v552 = vpack.c.bf16 %v526, %v525
    %v553 = vpack.c.bf16 %v528, %v527
    %v555 = vlaneseq
    %v556 = vshrl.u32 %v555, 7
    %v557 = vsub.s32 0, %v556
    %v558 = vrot.slane %v545, %v557
    %v576 = vunpack.c.l.b16 %v529
    %v577 = vunpack.c.l.b16 %v530
    %v578 = vunpack.c.l.b16 %v531
    %v579 = vunpack.c.l.b16 %v532
    %v580 = vunpack.c.l.b16 %v533
    %v581 = vunpack.c.l.b16 %v534
    %v582 = vunpack.c.l.b16 %v535
    %v583 = vunpack.c.l.b16 %v536
    %v584 = vunpack.c.l.b16 %v537
    %v585 = vunpack.c.l.b16 %v538
    %v586 = vunpack.c.l.b16 %v539
    %v587 = vunpack.c.l.b16 %v540
    %v588 = vunpack.c.l.b16 %v541
    %v589 = vunpack.c.l.b16 %v542
    %v590 = vunpack.c.l.b16 %v543
    %v591 = vunpack.c.l.b16 %v544
    %v592 = vpack.c.b16 %v577, %v576
    %v593 = vpack.c.b16 %v579, %v578
    %v594 = vpack.c.b16 %v581, %v580
    %v595 = vpack.c.b16 %v583, %v582
    %v596 = vpack.c.b16 %v585, %v584
    %v597 = vpack.c.b16 %v587, %v586
    %v598 = vpack.c.b16 %v589, %v588
    %v599 = vpack.c.b16 %v591, %v590
    %608 = vmatprep.subr.bf16.mxu0 0
    %609 = vmatpush1.bf16.msra.mxu0 %v592
    %610 = vmatprep.subr.bf16.mxu0 0
    %611 = vmatpush1.bf16.msra.mxu0 %v593
    %612 = vmatprep.subr.bf16.mxu0 0
    %613 = vmatpush1.bf16.msra.mxu0 %v594
    %614 = vmatprep.subr.bf16.mxu0 0
    %615 = vmatpush1.bf16.msra.mxu0 %v595
    %616 = vmatprep.subr.bf16.mxu0 0
    %617 = vmatpush1.bf16.msra.mxu0 %v596
    %618 = vmatprep.subr.bf16.mxu0 0
    %619 = vmatpush1.bf16.msra.mxu0 %v597
    %620 = vmatprep.subr.bf16.mxu0 0
    %621 = vmatpush1.bf16.msra.mxu0 %v598
    %622 = vmatprep.subr.bf16.mxu0 0
    %623 = vmatpush1.bf16.msra.mxu0 %v599
    %624 = vmatprep.subr.bf16.mxu0 0
    %625 = vmatpush1.bf16.msra.mxu0 0
    %626 = vmatprep.subr.bf16.mxu0 0
    %627 = vmatpush1.bf16.msra.mxu0 0
    %628 = vmatprep.subr.bf16.mxu0 0
    %629 = vmatpush1.bf16.msra.mxu0 0
    %630 = vmatprep.subr.bf16.mxu0 0
    %631 = vmatpush1.bf16.msra.mxu0 0
    %632 = vmatprep.subr.bf16.mxu0 0
    %633 = vmatpush1.bf16.msra.mxu0 0
    %634 = vmatprep.subr.bf16.mxu0 0
    %635 = vmatpush1.bf16.msra.mxu0 0
    %636 = vmatprep.subr.bf16.mxu0 0
    %637 = vmatpush1.bf16.msra.mxu0 0
    %638 = vmatprep.subr.bf16.mxu0 0
    %639 = vmatpush1.bf16.msra.mxu0 0
    %640 = vmatprep.mubr.bf16.mxu0 0
    %641 = vmatmul.mubr.bf16.gmra.mrb[0].mxu0 %v546
    %v642 = vpop.f32.mrb[0].mxu0
    %v643 = vadd.f32 %v558, %v642
    %v644 = vpop.f32.mrb[0].mxu0
    %v645 = vpop.f32.mrb[0].mxu0
    %v646 = vadd.f32 %v558, %v645
    %v647 = vpop.f32.mrb[0].mxu0
    %648 = vmatprep.mubr.bf16.mxu0 0
    %649 = vmatmul.mubr.bf16.gmra.mrb[0].mxu0 %v547
    %v650 = vpop.f32.mrb[0].mxu0
    %v651 = vadd.f32 %v558, %v650
    %v652 = vpop.f32.mrb[0].mxu0
    %v653 = vpop.f32.mrb[0].mxu0
    %v654 = vadd.f32 %v558, %v653
    %v655 = vpop.f32.mrb[0].mxu0
    %656 = vmatprep.mubr.bf16.mxu0 0
    %657 = vmatmul.mubr.bf16.gmra.mrb[0].mxu0 %v548
    %v658 = vpop.f32.mrb[0].mxu0
    %v659 = vadd.f32 %v558, %v658
    %v660 = vpop.f32.mrb[0].mxu0
    %v661 = vpop.f32.mrb[0].mxu0
    %v662 = vadd.f32 %v558, %v661
    %v663 = vpop.f32.mrb[0].mxu0
    %664 = vmatprep.mubr.bf16.mxu0 0
    %665 = vmatmul.mubr.bf16.gmra.mrb[0].mxu0 %v549
    %v666 = vpop.f32.mrb[0].mxu0
    %v667 = vadd.f32 %v558, %v666
    %v668 = vpop.f32.mrb[0].mxu0
    %v669 = vpop.f32.mrb[0].mxu0
    %v670 = vadd.f32 %v558, %v669
    %v671 = vpop.f32.mrb[0].mxu0
    %672 = vmatprep.mubr.bf16.mxu0 0
    %673 = vmatmul.mubr.bf16.gmra.mrb[0].mxu0 %v550
    %v674 = vpop.f32.mrb[0].mxu0
    %v675 = vadd.f32 %v558, %v674
    %v676 = vpop.f32.mrb[0].mxu0
    %v677 = vpop.f32.mrb[0].mxu0
    %v678 = vadd.f32 %v558, %v677
    %v679 = vpop.f32.mrb[0].mxu0
    %680 = vmatprep.mubr.bf16.mxu0 0
    %681 = vmatmul.mubr.bf16.gmra.mrb[0].mxu0 %v551
    %v682 = vpop.f32.mrb[0].mxu0
    %v683 = vadd.f32 %v558, %v682
    %v684 = vpop.f32.mrb[0].mxu0
    %v685 = vpop.f32.mrb[0].mxu0
    %v686 = vadd.f32 %v558, %v685
    %v687 = vpop.f32.mrb[0].mxu0
    %688 = vmatprep.mubr.bf16.mxu0 0
    %689 = vmatmul.mubr.bf16.gmra.mrb[0].mxu0 %v552
    %v690 = vpop.f32.mrb[0].mxu0
    %v691 = vadd.f32 %v558, %v690
    %v692 = vpop.f32.mrb[0].mxu0
    %v693 = vpop.f32.mrb[0].mxu0
    %v694 = vadd.f32 %v558, %v693
    %v695 = vpop.f32.mrb[0].mxu0
    %696 = vmatprep.mubr.bf16.mxu0 0
    %697 = vmatmul.mubr.bf16.gmra.mrb[0].mxu0 %v553
    %v698 = vpop.f32.mrb[0].mxu0
    %v699 = vadd.f32 %v558, %v698
    %v700 = vpop.f32.mrb[0].mxu0
    %v701 = vpop.f32.mrb[0].mxu0
    %v702 = vadd.f32 %v558, %v701
    %v703 = vpop.f32.mrb[0].mxu0
    %704 = vdwg.mxu0
    %v705 = vmax.f32 %v643, 0.0
    %v706 = vmax.f32 %v646, 0.0
    %v707 = vmax.f32 %v651, 0.0
    %v708 = vmax.f32 %v654, 0.0
    %v709 = vmax.f32 %v659, 0.0
    %v710 = vmax.f32 %v662, 0.0
    %v711 = vmax.f32 %v667, 0.0
    %v712 = vmax.f32 %v670, 0.0
    %v713 = vmax.f32 %v675, 0.0
    %v714 = vmax.f32 %v678, 0.0
    %v715 = vmax.f32 %v683, 0.0
    %v716 = vmax.f32 %v686, 0.0
    %v717 = vmax.f32 %v691, 0.0
    %v718 = vmax.f32 %v694, 0.0
    %v719 = vmax.f32 %v699, 0.0
    %v720 = vmax.f32 %v702, 0.0
    %v721 = vld [vmem:[%s7] sm:$0x1]
    %v722 = vunpack.c.l.bf16 %v721
    %v723 = vld [vmem:[%s8] sm:$0x1]
    %v724 = vlaneseq
    %v725 = vshrl.u32 %v724, 7
    %v726 = vsub.s32 0, %v725
    %v727 = vrot.slane %v722, %v726
    %v728 = vmul.f32 %v705, %v727
    %v729 = vmul.f32 %v706, %v727
    %v730 = vmul.f32 %v707, %v727
    %v731 = vmul.f32 %v708, %v727
    %v732 = vmul.f32 %v709, %v727
    %v733 = vmul.f32 %v710, %v727
    %v734 = vmul.f32 %v711, %v727
    %v735 = vmul.f32 %v712, %v727
    %v736 = vmul.f32 %v713, %v727
    %v737 = vmul.f32 %v714, %v727
    %v738 = vmul.f32 %v715, %v727
    %v739 = vmul.f32 %v716, %v727
    %v740 = vmul.f32 %v717, %v727
    %v741 = vmul.f32 %v718, %v727
    %v742 = vmul.f32 %v719, %v727
    %v743 = vmul.f32 %v720, %v727
    %744 = vadd.xlane.f32.xlu0 %v728
    %v745 = vpop.xlane.xlu0 %744
    %746 = vadd.xlane.f32.xlu0 %v729
    %v747 = vpop.xlane.xlu0 %746
    %748 = vadd.xlane.f32.xlu0 %v730
    %v749 = vpop.xlane.xlu0 %748
    %750 = vadd.xlane.f32.xlu0 %v731
    %v751 = vpop.xlane.xlu0 %750
    %752 = vadd.xlane.f32.xlu0 %v732
    %v753 = vpop.xlane.xlu0 %752
    %754 = vadd.xlane.f32.xlu0 %v733
    %v755 = vpop.xlane.xlu0 %754
    %756 = vadd.xlane.f32.xlu0 %v734
    %v757 = vpop.xlane.xlu0 %756
    %758 = vadd.xlane.f32.xlu0 %v735
    %v759 = vpop.xlane.xlu0 %758
    %760 = vadd.xlane.f32.xlu0 %v736
    %v761 = vpop.xlane.xlu0 %760
    %762 = vadd.xlane.f32.xlu0 %v737
    %v763 = vpop.xlane.xlu0 %762
    %764 = vadd.xlane.f32.xlu0 %v738
    %v765 = vpop.xlane.xlu0 %764
    %766 = vadd.xlane.f32.xlu0 %v739
    %v767 = vpop.xlane.xlu0 %766
    %768 = vadd.xlane.f32.xlu0 %v740
    %v769 = vpop.xlane.xlu0 %768
    %770 = vadd.xlane.f32.xlu0 %v741
    %v771 = vpop.xlane.xlu0 %770
    %772 = vadd.xlane.f32.xlu0 %v742
    %v773 = vpop.xlane.xlu0 %772
    %774 = vadd.xlane.f32.xlu0 %v743
    %v775 = vpop.xlane.xlu0 %774
    %v777 = vlaneseq
    %v778 = vshrl.u32 %v777, 7
    %v779 = vsub.s32 0, %v778
    %v780 = vrot.slane %v723, %v779
    %v782 = vadd.f32 %v745, %v780
    %v783 = vadd.f32 %v747, %v780
    %v784 = vadd.f32 %v749, %v780
    %v785 = vadd.f32 %v751, %v780
    %v786 = vadd.f32 %v753, %v780
    %v787 = vadd.f32 %v755, %v780
    %v788 = vadd.f32 %v757, %v780
    %v789 = vadd.f32 %v759, %v780
    %v790 = vadd.f32 %v761, %v780
    %v791 = vadd.f32 %v763, %v780
    %v792 = vadd.f32 %v765, %v780
    %v793 = vadd.f32 %v767, %v780
    %v794 = vadd.f32 %v769, %v780
    %v795 = vadd.f32 %v771, %v780
    %v796 = vadd.f32 %v773, %v780
    %v797 = vadd.f32 %v775, %v780
    %v798 = vmax.f32 %v782, 0.0
    %v799 = vmax.f32 %v783, 0.0
    %v800 = vmax.f32 %v784, 0.0
    %v801 = vmax.f32 %v785, 0.0
    %v802 = vmax.f32 %v786, 0.0
    %v803 = vmax.f32 %v787, 0.0
    %v804 = vmax.f32 %v788, 0.0
    %v805 = vmax.f32 %v789, 0.0
    %v806 = vmax.f32 %v790, 0.0
    %v807 = vmax.f32 %v791, 0.0
    %v808 = vmax.f32 %v792, 0.0
    %v809 = vmax.f32 %v793, 0.0
    %v810 = vmax.f32 %v794, 0.0
    %v811 = vmax.f32 %v795, 0.0
    %v812 = vmax.f32 %v796, 0.0
    %v813 = vmax.f32 %v797, 0.0
    %814 = vst [vmem:[#allocation10] sm:$0xff] %v798
    %815 = vst [vmem:[#allocation10 + $0x8] sm:$0xff] %v799
    %816 = vst [vmem:[#allocation10 + $0x10] sm:$0xff] %v800
    %817 = vst [vmem:[#allocation10 + $0x18] sm:$0xff] %v801
    %818 = vst [vmem:[#allocation10 + $0x20] sm:$0xff] %v802
    %819 = vst [vmem:[#allocation10 + $0x28] sm:$0xff] %v803
    %820 = vst [vmem:[#allocation10 + $0x30] sm:$0xff] %v804
    %821 = vst [vmem:[#allocation10 + $0x38] sm:$0xff] %v805
    %822 = vst [vmem:[#allocation10 + $0x40] sm:$0xff] %v806
    %823 = vst [vmem:[#allocation10 + $0x48] sm:$0xff] %v807
    %824 = vst [vmem:[#allocation10 + $0x50] sm:$0xff] %v808
    %825 = vst [vmem:[#allocation10 + $0x58] sm:$0xff] %v809
    %826 = vst [vmem:[#allocation10 + $0x60] sm:$0xff] %v810
    %827 = vst [vmem:[#allocation10 + $0x68] sm:$0xff] %v811
    %828 = vst [vmem:[#allocation10 + $0x70] sm:$0xff] %v812
    %829 = vst [vmem:[#allocation10 + $0x78] sm:$0xff] %v813
    // Predicated region
    $region54: #{tpu_custom_call.1} parent=1 // pred_check
      _
    $region55: #{tpu_custom_call.1} parent=1 // pred_check_branch
      %831 = sbr.rel (0) target = $region57
    $region56: #{tpu_custom_call.1} parent=1 // pred_region
      %s833 = ssub.s32 2048, 2048
      %834 = vsyncadd [#allocation4], %s833
      %s835 = sshll.u32 [#allocation10], 4
      %s836 = int_to_ptr.vmem [resolvable:$true] %s835
      %841 = dma.vmem_to_hbm [thread:$0]  %s836, 2048, %s9, [#allocation4], 128, 128, 8
    $region57: #{tpu_custom_call.1} parent=1 // pred_fallthru
      _
    // Predicated region
    $region58: #{tpu_custom_call.1} parent=1 // pred_check
      _
    $region59: #{tpu_custom_call.1} parent=1 // pred_check_branch
      %843 = sbr.rel (0) target = $region61
    $region60: #{tpu_custom_call.1} parent=1 // pred_region
      %844 = dma.done [#allocation4], 2048
    $region61: #{tpu_custom_call.1} parent=1 // pred_fallthru
      _
    %845 = vsyncpa [#allocation3], 1
    %846 = vsyncpa [#allocation6], 1
    %847 = vsyncpa [#allocation9], 1
    %848 = vsyncpa [#allocation4], 1

</llo_original>
